<compile_context>
chip_gen: v5e
topology: v5e:2x2
jax: 0.10.0
libtpu: 0.0.40
codegen_flags: <defaults>
</compile_context>

<pallas_src>
import jax
import jax.numpy as jnp
from jax.experimental import pallas as pl
from jax.experimental.pallas import tpu as pltpu

CLIP_MEAN = jnp.array([0.48145466, 0.4578275, 0.40821073], dtype=jnp.float32)
CLIP_STD = jnp.array([0.26862954, 0.26130258, 0.27577711], dtype=jnp.float32)


def _round_up(v, m):
    return ((v + m - 1) // m) * m


# ----------------------------------------------------------------------------
# Fused kernel: K-tiled encoder matmul (+bias) -> per-row (e.e, e.t) statistics
# Grid: (d_split "parallel" [megacore], k "arbitrary" [reduction, last])
# ----------------------------------------------------------------------------
def _encode_stats_kernel(x_ref, w_ref, b_ref, t_ref, s1_ref, s2_ref, acc_ref):
    k = pl.program_id(1)

    @pl.when(k == 0)
    def _init():
        acc_ref[...] = jnp.zeros_like(acc_ref)

    # MXU: (M, tk) bf16 @ (tk, Dh) bf16 accumulated in f32
    acc_ref[...] += jnp.dot(x_ref[...], w_ref[...], preferred_element_type=jnp.float32)

    @pl.when(k == pl.num_programs(1) - 1)
    def _finalize():
        e = acc_ref[...] + b_ref[...]                                 # (M, Dh), VMEM-resident
        s1 = jnp.sum(e * e, axis=-1, keepdims=True)                   # partial ||e||^2
        s2 = jnp.sum(e * t_ref[...], axis=-1, keepdims=True)          # partial e . t_norm
        s1_ref[...] = s1.reshape(s1_ref.shape)
        s2_ref[...] = s2.reshape(s2_ref.shape)


def fused_encode_stats(x, w_eff, bias, t_norm, *, tk=4096):
    """x:(M,F) bf16 @ w_eff:(F,D) bf16 + bias -> per-row (||e||^2, e.t) partials, D-split."""
    M, F = x.shape
    F2, D = w_eff.shape
    assert F == F2 and bias.shape == (1, D) and t_norm.shape == (1, D)

    # Split D across the "parallel" grid axis: on v7x both TensorCores stream disjoint
    # weight halves (1x total bytes); on v5e/v6e the splits run sequentially at no extra cost.
    n_split = 2 if D % 256 == 0 else 1
    dh = D // n_split

    itemsize = jnp.dtype(x.dtype).itemsize

    # VMEM budget from the actual chip (64 MiB physical on v7x, 128 MiB on v5e/v6e).
    try:
        vmem_cap = pltpu.get_tpu_info().vmem_capacity_bytes
    except Exception:
        vmem_cap = 64 << 20                                           # conservative (v7x)
    budget = int(vmem_cap * 0.70)

    # Large, aligned K tile (amortizes ~0.35us/grid-step), shrunk until it fits the budget.
    tk = min(tk, _round_up(F, 512))
    tk = max(512, _round_up(tk, 512))

    def _vmem_need(tk_):
        x_blk = 2 * M * tk_ * itemsize        # double-buffered activations
        w_blk = 2 * tk_ * dh * itemsize       # double-buffered weight
        acc = M * dh * 4                      # f32 accumulator
        small = 8 * D * 4 + 8 * M * 4         # bias / text / scalar outputs
        return x_blk + w_blk + acc + small

    while tk > 512 and _vmem_need(tk) > budget:
        tk //= 2

    # Zero-pad the contraction dim so it tiles exactly (padded terms contribute 0 -> exact).
    f_pad = _round_up(F, tk)
    if f_pad != F:
        x = jnp.pad(x, ((0, 0), (0, f_pad - F)))
        w_eff = jnp.pad(w_eff, ((0, f_pad - F), (0, 0)))
    n_k = f_pad // tk

    return pl.pallas_call(
        _encode_stats_kernel,
        out_shape=(jax.ShapeDtypeStruct((n_split, M, 1), jnp.float32),
                   jax.ShapeDtypeStruct((n_split, M, 1), jnp.float32)),
        grid=(n_split, n_k),
        in_specs=[
            pl.BlockSpec((M, tk), lambda s, k: (0, k)),    # activations (bf16), tm = M
            pl.BlockSpec((tk, dh), lambda s, k: (k, s)),   # folded weight (bf16), D-split
            pl.BlockSpec((1, dh), lambda s, k: (0, s)),    # folded bias (f32)
            pl.BlockSpec((1, dh), lambda s, k: (0, s)),    # pre-normalized text (f32)
        ],
        out_specs=(
            pl.BlockSpec((1, M, 1), lambda s, k: (s, 0, 0)),
            pl.BlockSpec((1, M, 1), lambda s, k: (s, 0, 0)),
        ),
        scratch_shapes=[pltpu.VMEM((M, dh), jnp.float32)],  # embeddings never hit HBM
        compiler_params=pltpu.CompilerParams(
            dimension_semantics=("parallel", "arbitrary"),
            vmem_limit_bytes=budget),
    )(x, w_eff, bias, t_norm)


# ----------------------------------------------------------------------------
# Offline (one-time) linear-operator folding, done in f32; cast to bf16 LAST.
# ----------------------------------------------------------------------------
def _adaptive_pool_matrix(in_size, out_size):
    """(in_size, out_size) matrix reproducing torch AdaptiveAvgPool1d window averaging."""
    i = jnp.arange(in_size)[:, None]
    o = jnp.arange(out_size)[None, :]
    start = jnp.floor(o * in_size / out_size).astype(jnp.int32)
    end = jnp.ceil((o + 1) * in_size / out_size).astype(jnp.int32)
    inside = (i >= start) & (i < end)
    return inside.astype(jnp.float32) / (end - start).astype(jnp.float32)


def fold_linear_ops(w_img, C, H, W, S):
    """Fold AdaptiveAvgPool2d(S,S) + (.add(1).div(2) & clip normalize) into w_img."""
    D = w_img.shape[1]
    Ph = _adaptive_pool_matrix(H, S)                        # (H, S)
    Pw = _adaptive_pool_matrix(W, S)                        # (W, S)
    a_c = 1.0 / (2.0 * CLIP_STD)                            # per-channel scale
    b_c = (0.5 - CLIP_MEAN) / CLIP_STD                      # per-channel shift
    w4 = w_img.reshape(C, S, S, D)
    w_scaled = w4 * a_c[:, None, None, None]
    # W_eff[(c,h,w), d] = sum_{oh,ow} Ph[h,oh] Pw[w,ow] * a_c[c] * W_img[(c,oh,ow), d]
    w_eff = jnp.einsum("ho,wp,copd->chwd", Ph, Pw, w_scaled).reshape(C * H * W, D)
    bias = (w4 * b_c[:, None, None, None]).sum(axis=(0, 1, 2)).reshape(1, D)
    return w_eff, bias


# ----------------------------------------------------------------------------
# Wrapper reproducing AugCLIPLoss.forward
# ----------------------------------------------------------------------------
def aug_clip_loss(image, text_embed, w_img, output_size=8, augmentations_number=8):
    """AugCLIPLoss.forward with a synthetic linear image encoder and a given text embedding."""
    B, C, H, W = image.shape
    S = output_size

    # One-time weight folding in f32 (plain XLA, outside the kernel); cast to bf16 last so the
    # 1/(2*std) scales don't compound quantization error.
    w_eff, bias = fold_linear_ops(w_img, C, H, W, S)
    w_eff = w_eff.astype(jnp.bfloat16)
    # TODO(synk): a per-column-scaled int8 weight (v5e/v6e) or fp8 weight (v7x, no int MXU path)
    # would halve the dominant HBM weight stream again; kept bf16 here for portability.

    # pre-normalize the constant text embedding once (F.normalize on y)
    t_norm = text_embed / jnp.maximum(
        jnp.sqrt(jnp.sum(text_embed * text_embed, axis=-1, keepdims=True)), 1e-12)

    # TODO(synk): kornia RandomAffine/RandomPerspective (stochastic image warps) have no clean
    # Pallas equivalent and are treated as identity; the A-fold torch.tile then yields A
    # identical copies per image, so only the B unique rows are encoded and
    # mean over A*B distances == mean over B distances.
    x = image.reshape(B, C * H * W).astype(jnp.bfloat16)

    # TODO(synk): CLIP ViT-B/32 encode_image is a full vision transformer; replaced by a single
    # deterministic linear projection (folded into w_eff above, matmul runs in the Pallas kernel).
    s1_p, s2_p = fused_encode_stats(x, w_eff, bias, t_norm)

    # Tiny O(B) epilogue: combine D-split partials; with unit-norm t,
    # ||e/||e|| - t||^2 = 2 - 2*(e.t)*rsqrt(e.e)  (clamped at 0 before the sqrt).
    # TODO(synk): jnp.arcsin has no Mosaic lowering; applied in JAX glue on the tiny (B,) vector.
    s1 = jnp.sum(s1_p[..., 0], axis=0)                      # (B,)
    s2 = jnp.sum(s2_p[..., 0], axis=0)                      # (B,)
    d2 = jnp.clip(2.0 - 2.0 * s2 * jax.lax.rsqrt(jnp.maximum(s1, 1e-24)), 0.0, 4.0)
    d = jnp.sqrt(d2)
    dists = 2.0 * jnp.square(jnp.arcsin(jnp.clip(0.5 * d, 0.0, 1.0)))
    return jnp.mean(dists)


if __name__ == "__main__":
    key = jax.random.PRNGKey(0)
    k_img, k_w, k_txt = jax.random.split(key, 3)

    # small shapes: batch=2, channels=3 (RGB), spatial=16, pooled size S=8 (stands in for 224),
    # augmentations_number=8, embedding dim D=256 (lane-dense, stands in for 512 and exercises
    # the 2-way D-split / megacore path)
    B, C, H, W = 2, 3, 16, 16
    S, A, D = 8, 8, 256

    image = jax.random.uniform(k_img, (B, C, H, W), jnp.float32, -1.0, 1.0)   # image in [-1, 1]
    w_img = jax.random.normal(k_w, (C * S * S, D), jnp.float32) * 0.02        # synthetic image encoder
    # TODO(synk): CLIP encode_text (tokenizer + text transformer) is untranslatable; use a
    # deterministic synthetic text embedding standing in for its output.
    text_embed = jax.random.normal(k_txt, (1, D), jnp.float32)

    loss = aug_clip_loss(image, text_embed, w_img, output_size=S, augmentations_number=A)
    loss = jax.block_until_ready(loss)
    assert loss.shape == () and jnp.isfinite(loss)
    print("KERNEL_OK")
</pallas_src>

<mosaic_0001>
module attributes {stable_mosaic.version = 11 : i64} {
  func.func @_encode_stats_kernel(%arg0: i32, %arg1: i32, %arg2: memref<2x1024xbf16, #tpu.memory_space<vmem>>, %arg3: memref<1024x128xbf16, #tpu.memory_space<vmem>>, %arg4: memref<1x128xf32, #tpu.memory_space<vmem>>, %arg5: memref<1x128xf32, #tpu.memory_space<vmem>>, %arg6: memref<1x2x1xf32, #tpu.memory_space<vmem>>, %arg7: memref<1x2x1xf32, #tpu.memory_space<vmem>>, %arg8: memref<2x128xf32, #tpu.memory_space<vmem>>) attributes {dimension_semantics = [#tpu.dimension_semantics<parallel>, #tpu.dimension_semantics<arbitrary>], iteration_bounds = array<i64: 2, 1>, scalar_prefetch = 0 : i64, scratch_operands = 1 : i64, tpu.core_type = #tpu.core_type<tc>, window_params = [{transform_indices = @transform_0, window_bounds = array<i64: 2, 1024>}, {transform_indices = @transform_1, window_bounds = array<i64: 1024, 128>}, {transform_indices = @transform_2, window_bounds = array<i64: 1, 128>}, {transform_indices = @transform_3, window_bounds = array<i64: 1, 128>}, {transform_indices = @transform_4, window_bounds = array<i64: 1, 2, 1>}, {transform_indices = @transform_5, window_bounds = array<i64: 1, 2, 1>}]} {
    %c0_i32 = arith.constant 0 : i32
    %0 = arith.cmpi eq, %arg1, %c0_i32 : i32
    %1 = arith.extui %0 : i1 to i32
    %c0_i32_0 = arith.constant 0 : i32
    %2 = arith.cmpi ne, %1, %c0_i32_0 : i32
    scf.if %2 {
      %cst_10 = arith.constant 0.000000e+00 : f32
      %12 = vector.broadcast %cst_10 : f32 to vector<2x128xf32>
      %c0_11 = arith.constant 0 : index
      %c0_12 = arith.constant 0 : index
      %13 = vector.load %arg8[%c0_11, %c0_12] : memref<2x128xf32, #tpu.memory_space<vmem>>, vector<2x128xf32>
      tpu.vector_store %arg8[%c0_11, %c0_12], %12 {strides = array<i32>} : memref<2x128xf32, #tpu.memory_space<vmem>>, vector<2x128xf32>,
    } else {
    }
    %c0 = arith.constant 0 : index
    %c0_1 = arith.constant 0 : index
    %3 = vector.load %arg8[%c0, %c0_1] : memref<2x128xf32, #tpu.memory_space<vmem>>, vector<2x128xf32>
    %c0_2 = arith.constant 0 : index
    %c0_3 = arith.constant 0 : index
    %4 = vector.load %arg2[%c0_2, %c0_3] : memref<2x1024xbf16, #tpu.memory_space<vmem>>, vector<2x1024xbf16>
    %c0_4 = arith.constant 0 : index
    %c0_5 = arith.constant 0 : index
    %5 = vector.load %arg3[%c0_4, %c0_5] : memref<1024x128xbf16, #tpu.memory_space<vmem>>, vector<1024x128xbf16>
    %cst = arith.constant dense<0.000000e+00> : vector<2x128xf32>
    %6 = tpu.matmul %4, %5, %cst {dimension_numbers = #tpu.dot_dimension_numbers<[1], [0], [0], [1], [0, 0, 1, 1], [], []>} : vector<2x1024xbf16>, vector<1024x128xbf16>, vector<2x128xf32> -> vector<2x128xf32>
    %7 = arith.addf %3, %6 : vector<2x128xf32>
    %c0_6 = arith.constant 0 : index
    %c0_7 = arith.constant 0 : index
    %8 = vector.load %arg8[%c0_6, %c0_7] : memref<2x128xf32, #tpu.memory_space<vmem>>, vector<2x128xf32>
    tpu.vector_store %arg8[%c0_6, %c0_7], %7 {strides = array<i32>} : memref<2x128xf32, #tpu.memory_space<vmem>>, vector<2x128xf32>,
    %c0_i32_8 = arith.constant 0 : i32
    %9 = arith.cmpi eq, %arg1, %c0_i32_8 : i32
    %10 = arith.extui %9 : i1 to i32
    %c0_i32_9 = arith.constant 0 : i32
    %11 = arith.cmpi ne, %10, %c0_i32_9 : i32
    scf.if %11 {
      %c0_10 = arith.constant 0 : index
      %c0_11 = arith.constant 0 : index
      %12 = vector.load %arg8[%c0_10, %c0_11] : memref<2x128xf32, #tpu.memory_space<vmem>>, vector<2x128xf32>
      %c0_12 = arith.constant 0 : index
      %c0_13 = arith.constant 0 : index
      %13 = vector.load %arg4[%c0_12, %c0_13] : memref<1x128xf32, #tpu.memory_space<vmem>>, vector<1x128xf32>
      %14 = vector.broadcast %13 : vector<1x128xf32> to vector<2x128xf32>
      %15 = arith.addf %12, %14 : vector<2x128xf32>
      %16 = arith.mulf %15, %15 : vector<2x128xf32>
      %cst_14 = arith.constant dense<0.000000e+00> : vector<2xf32>
      %17 = vector.multi_reduction <add>, %16, %cst_14 [1] : vector<2x128xf32> to vector<2xf32>
      %18 = vector.shape_cast %17 : vector<2xf32> to vector<2x1xf32>
      %c0_15 = arith.constant 0 : index
      %c0_16 = arith.constant 0 : index
      %19 = vector.load %arg5[%c0_15, %c0_16] : memref<1x128xf32, #tpu.memory_space<vmem>>, vector<1x128xf32>
      %20 = vector.broadcast %19 : vector<1x128xf32> to vector<2x128xf32>
      %21 = arith.mulf %15, %20 : vector<2x128xf32>
      %cst_17 = arith.constant dense<0.000000e+00> : vector<2xf32>
      %22 = vector.multi_reduction <add>, %21, %cst_17 [1] : vector<2x128xf32> to vector<2xf32>
      %23 = vector.shape_cast %22 : vector<2xf32> to vector<2x1xf32>
      %24 = vector.shape_cast %18 : vector<2x1xf32> to vector<1x2x1xf32>
      %c0_18 = arith.constant 0 : index
      %c0_19 = arith.constant 0 : index
      %c0_20 = arith.constant 0 : index
      %25 = vector.load %arg6[%c0_18, %c0_19, %c0_20] : memref<1x2x1xf32, #tpu.memory_space<vmem>>, vector<1x2x1xf32>
      tpu.vector_store %arg6[%c0_18, %c0_19, %c0_20], %24 {strides = array<i32>} : memref<1x2x1xf32, #tpu.memory_space<vmem>>, vector<1x2x1xf32>,
      %26 = vector.shape_cast %23 : vector<2x1xf32> to vector<1x2x1xf32>
      %c0_21 = arith.constant 0 : index
      %c0_22 = arith.constant 0 : index
      %c0_23 = arith.constant 0 : index
      %27 = vector.load %arg7[%c0_21, %c0_22, %c0_23] : memref<1x2x1xf32, #tpu.memory_space<vmem>>, vector<1x2x1xf32>
      tpu.vector_store %arg7[%c0_21, %c0_22, %c0_23], %26 {strides = array<i32>} : memref<1x2x1xf32, #tpu.memory_space<vmem>>, vector<1x2x1xf32>,
    } else {
    }
    return
  }
  func.func @transform_0(%arg0: i32, %arg1: i32) -> (i32, i32) {
    %c0_i32 = arith.constant 0 : i32
    %c0_i32_0 = arith.constant 0 : i32
    return %c0_i32, %arg1 : i32, i32
  }
  func.func @transform_1(%arg0: i32, %arg1: i32) -> (i32, i32) {
    %c0_i32 = arith.constant 0 : i32
    return %arg1, %arg0 : i32, i32
  }
  func.func @transform_2(%arg0: i32, %arg1: i32) -> (i32, i32) {
    %c0_i32 = arith.constant 0 : i32
    %c0_i32_0 = arith.constant 0 : i32
    return %c0_i32, %arg0 : i32, i32
  }
  func.func @transform_3(%arg0: i32, %arg1: i32) -> (i32, i32) {
    %c0_i32 = arith.constant 0 : i32
    %c0_i32_0 = arith.constant 0 : i32
    return %c0_i32, %arg0 : i32, i32
  }
  func.func @transform_4(%arg0: i32, %arg1: i32) -> (i32, i32, i32) {
    %c0_i32 = arith.constant 0 : i32
    %c0_i32_0 = arith.constant 0 : i32
    %c0_i32_1 = arith.constant 0 : i32
    return %arg0, %c0_i32, %c0_i32_0 : i32, i32, i32
  }
  func.func @transform_5(%arg0: i32, %arg1: i32) -> (i32, i32, i32) {
    %c0_i32 = arith.constant 0 : i32
    %c0_i32_0 = arith.constant 0 : i32
    %c0_i32_1 = arith.constant 0 : i32
    return %arg0, %c0_i32, %c0_i32_0 : i32, i32, i32
  }
}

</mosaic_0001>

<llo_original>
// kernel: tpu_custom_call.1
$region0: #{tpu_custom_call.1}
  #allocation0 [shape = 'u32[]', space=smem, size = 0x4, offset = 0x4, fixed_abs, tag = 'smem constant byte address 0x4 - core index']
  #allocation1 [shape = 'u32[72,128]{1,0:T(1,128)}', space=vmem, size = 0x9000, scoped, tag = 'internal scratch']
  #allocation2 [shape = 'f32[2,128]{1,0:T(2,128)}', space=vmem, size = 0x400, scoped, tag = 'scratch operand']
  %s0 = inlined_call_operand.hbm [shape: bf16[2,1024], index: 0, kind: input, shape index: {}]
  %s1 = inlined_call_operand.hbm [shape: bf16[1024,256], index: 1, kind: input, shape index: {}]
  %s2 = inlined_call_operand.hbm [shape: f32[1,256], index: 2, kind: input, shape index: {}]
  %s3 = inlined_call_operand.vmem [shape: f32[1,256], index: 3, kind: input, shape index: {}]
  %s4 = inlined_call_operand.vmem [shape: f32[2,2,1], index: 4, kind: output, shape index: {0}]
  %s5 = inlined_call_operand.vmem [shape: f32[2,2,1], index: 5, kind: output, shape index: {1}]
  %6 = xla_tuple %s4, %s5
  %s7 = sld [smem:[#allocation0]]
  $region77: #{tpu_custom_call.1} parent=0
    _
  %s9 = ssub.s32 1, %s7
  %s10 = scalar_select 0, %s9, %s7
  $region1: #{tpu_custom_call.1} parent=0
    #allocation3 [shape = 'u8[4096]{0}', space=vmem, size = 0x1000, scoped, tag = 'input window, operand 0, single buffered']
    #allocation4 [shape = 's32[2]{0}', space=sflag, size = 0x8, scoped, tag = 'scoped memory for tpu_custom_call.1']
    #allocation5 [shape = 'u8[524288]{0}', space=vmem, size = 0x80000, scoped, tag = 'input window, operand 1']
    #allocation6 [shape = 's32[2]{0}', space=sflag, size = 0x8, scoped, tag = 'scoped memory for tpu_custom_call.1']
    #allocation7 [shape = 'u8[1024]{0}', space=vmem, size = 0x400, scoped, tag = 'input window, operand 2']
    %11 = vsyncpa [#allocation4], 0
    %12 = vsyncpa [#allocation6], 0
    %s13 = scalar_lea.sflag [#allocation6], 1
    %14 = vsyncpa %s13, 0
    loop: start=0, step=1, limit=4
    $region2: #{tpu_custom_call.1} parent=1 // loop_pre_header
      _
    $region3: #{tpu_custom_call.1} parent=1 // loop_header
      %s16 = sphi 0, %s20
      %p17 = scmp.ge.s32.totalorder %s16, 4
      %s23 = sphi 0, %s35
      %s24 = sphi 0, %s31
      %s25 = sphi 0, %s23
      %s26 = sphi 0, %s24
      %s27 = sphi 0, %s25
      %s28 = sphi 0, %s26
      %s38 = sphi 0, %s40
      %s41 = sphi 0, %s38
      %s42 = sphi 0, %s41
      %s58 = sphi 0, %s42
      %s66 = sphi 0, %s68
      %s69 = sphi 0, %s66
      %s70 = sphi 0, %s69
      %s86 = sphi 0, %s70
      %s92 = sphi 0, %s94
      %s95 = sphi 0, %s92
      %s96 = sphi 0, %s95
      %s112 = sphi 0, %s96
      %s118 = sphi 0, %s120
      %s121 = sphi 0, %s118
      %s122 = sphi 0, %s121
      %s138 = sphi 0, %s122
      %s144 = sphi 0, %s146
      %s147 = sphi 0, %s144
      %s148 = sphi 0, %s147
      %s164 = sphi 0, %s148
      %s170 = sphi 0, %s172
      %s173 = sphi 0, %s170
      %s174 = sphi 0, %s173
      %s190 = sphi 0, %s174
    $region4: #{tpu_custom_call.1} parent=1 // loop_header_branch
      %19 = sbr.rel (%p17) target = $region8
    $region5: #{tpu_custom_call.1} parent=1 // loop_body
      %s21 = ssub.s32 %s16, 1
      %s22 = ssub.s32 %s16, 2
      %s29 = sadd.s32 1, %s24
      %p30 = scmp.ge.s32.totalorder %s29, 1
      %s31 = scalar_select %p30, 0, %s29
      %s32 = sadd.s32 1, %s23
      %s33 = scalar_select %p30, %s32, %s23
      %p34 = scmp.ge.s32.totalorder %s33, 2
      %s35 = scalar_select %p34, 0, %s33
      %s36 = ssub.s32 %s24, %s31
      %p37 = scmp.eq.s32.totalorder %s36, 0
      %s39 = sadd.s32 %s38, 1
      %s40 = scalar_select %p37, %s38, %s39
      %p43 = pneg %p37
      %p44 = scmp.eq.s32.totalorder %s16, 1
      %p45 = por %p43, %p44
      %p46 = scmp.ne.s32.totalorder %s38, %s41
      %p47 = scmp.eq.s32.totalorder %s16, 0
      %p48 = por %p46, %p47
      %p49 = scmp.ne.s32.totalorder %s38, %s41
      %p50 = scmp.eq.s32.totalorder %s21, 1
      %p51 = por %p49, %p50
      %p52 = scmp.ne.s32.totalorder %s41, %s42
      %p53 = scmp.eq.s32.totalorder %s21, 0
      %p54 = por %p52, %p53
      %p55 = scmp.ne.s32.totalorder %s41, %s42
      %p56 = scmp.eq.s32.totalorder %s22, 1
      %p57 = por %p55, %p56
      %p59 = scmp.ne.s32.totalorder %s42, %s58
      %p60 = scmp.eq.s32.totalorder %s22, 0
      %p61 = por %p59, %p60
      %s62 = ssub.s32 %s24, %s31
      %s63 = ssub.s32 %s23, %s35
      %s64 = sor.u32 %s62, %s63
      %p65 = scmp.eq.s32.totalorder %s64, 0
      %s67 = sadd.s32 %s66, 1
      %s68 = scalar_select %p65, %s66, %s67
      %p71 = pneg %p65
      %p72 = scmp.eq.s32.totalorder %s16, 1
      %p73 = por %p71, %p72
      %p74 = scmp.ne.s32.totalorder %s66, %s69
      %p75 = scmp.eq.s32.totalorder %s16, 0
      %p76 = por %p74, %p75
      %p77 = scmp.ne.s32.totalorder %s66, %s69
      %p78 = scmp.eq.s32.totalorder %s21, 1
      %p79 = por %p77, %p78
      %p80 = scmp.ne.s32.totalorder %s69, %s70
      %p81 = scmp.eq.s32.totalorder %s21, 0
      %p82 = por %p80, %p81
      %p83 = scmp.ne.s32.totalorder %s69, %s70
      %p84 = scmp.eq.s32.totalorder %s22, 1
      %p85 = por %p83, %p84
      %p87 = scmp.ne.s32.totalorder %s70, %s86
      %p88 = scmp.eq.s32.totalorder %s22, 0
      %p89 = por %p87, %p88
      %s90 = ssub.s32 %s23, %s35
      %p91 = scmp.eq.s32.totalorder %s90, 0
      %s93 = sadd.s32 %s92, 1
      %s94 = scalar_select %p91, %s92, %s93
      %p97 = pneg %p91
      %p98 = scmp.eq.s32.totalorder %s16, 1
      %p99 = por %p97, %p98
      %p100 = scmp.ne.s32.totalorder %s92, %s95
      %p101 = scmp.eq.s32.totalorder %s16, 0
      %p102 = por %p100, %p101
      %p103 = scmp.ne.s32.totalorder %s92, %s95
      %p104 = scmp.eq.s32.totalorder %s21, 1
      %p105 = por %p103, %p104
      %p106 = scmp.ne.s32.totalorder %s95, %s96
      %p107 = scmp.eq.s32.totalorder %s21, 0
      %p108 = por %p106, %p107
      %p109 = scmp.ne.s32.totalorder %s95, %s96
      %p110 = scmp.eq.s32.totalorder %s22, 1
      %p111 = por %p109, %p110
      %p113 = scmp.ne.s32.totalorder %s96, %s112
      %p114 = scmp.eq.s32.totalorder %s22, 0
      %p115 = por %p113, %p114
      %s116 = ssub.s32 %s23, %s35
      %p117 = scmp.eq.s32.totalorder %s116, 0
      %s119 = sadd.s32 %s118, 1
      %s120 = scalar_select %p117, %s118, %s119
      %p123 = pneg %p117
      %p124 = scmp.eq.s32.totalorder %s16, 1
      %p125 = por %p123, %p124
      %p126 = scmp.ne.s32.totalorder %s118, %s121
      %p127 = scmp.eq.s32.totalorder %s16, 0
      %p128 = por %p126, %p127
      %p129 = scmp.ne.s32.totalorder %s118, %s121
      %p130 = scmp.eq.s32.totalorder %s21, 1
      %p131 = por %p129, %p130
      %p132 = scmp.ne.s32.totalorder %s121, %s122
      %p133 = scmp.eq.s32.totalorder %s21, 0
      %p134 = por %p132, %p133
      %p135 = scmp.ne.s32.totalorder %s121, %s122
      %p136 = scmp.eq.s32.totalorder %s22, 1
      %p137 = por %p135, %p136
      %p139 = scmp.ne.s32.totalorder %s122, %s138
      %p140 = scmp.eq.s32.totalorder %s22, 0
      %p141 = por %p139, %p140
      %s142 = ssub.s32 %s23, %s35
      %p143 = scmp.eq.s32.totalorder %s142, 0
      %s145 = sadd.s32 %s144, 1
      %s146 = scalar_select %p143, %s144, %s145
      %p149 = pneg %p143
      %p150 = scmp.eq.s32.totalorder %s16, 1
      %p151 = por %p149, %p150
      %p152 = scmp.ne.s32.totalorder %s144, %s147
      %p153 = scmp.eq.s32.totalorder %s16, 0
      %p154 = por %p152, %p153
      %p155 = scmp.ne.s32.totalorder %s144, %s147
      %p156 = scmp.eq.s32.totalorder %s21, 1
      %p157 = por %p155, %p156
      %p158 = scmp.ne.s32.totalorder %s147, %s148
      %p159 = scmp.eq.s32.totalorder %s21, 0
      %p160 = por %p158, %p159
      %p161 = scmp.ne.s32.totalorder %s147, %s148
      %p162 = scmp.eq.s32.totalorder %s22, 1
      %p163 = por %p161, %p162
      %p165 = scmp.ne.s32.totalorder %s148, %s164
      %p166 = scmp.eq.s32.totalorder %s22, 0
      %p167 = por %p165, %p166
      %s168 = ssub.s32 %s23, %s35
      %p169 = scmp.eq.s32.totalorder %s168, 0
      %s171 = sadd.s32 %s170, 1
      %s172 = scalar_select %p169, %s170, %s171
      %p175 = pneg %p169
      %p176 = scmp.eq.s32.totalorder %s16, 1
      %p177 = por %p175, %p176
      %p178 = scmp.ne.s32.totalorder %s170, %s173
      %p179 = scmp.eq.s32.totalorder %s16, 0
      %p180 = por %p178, %p179
      %p181 = scmp.ne.s32.totalorder %s170, %s173
      %p182 = scmp.eq.s32.totalorder %s21, 1
      %p183 = por %p181, %p182
      %p184 = scmp.ne.s32.totalorder %s173, %s174
      %p185 = scmp.eq.s32.totalorder %s21, 0
      %p186 = por %p184, %p185
      %p187 = scmp.ne.s32.totalorder %s173, %s174
      %p188 = scmp.eq.s32.totalorder %s22, 1
      %p189 = por %p187, %p188
      %p191 = scmp.ne.s32.totalorder %s174, %s190
      %p192 = scmp.eq.s32.totalorder %s22, 0
      %p193 = por %p191, %p192
      %p194 = scmp.le.s32.totalorder 1, %s16
      %p195 = scmp.lt.s32.totalorder %s16, 3
      %p196 = pnand %p194, %p195
      %p197 = pneg %p196
      // Predicated region
      $region9: #{tpu_custom_call.1} parent=5 // pred_check
        _
      $region10: #{tpu_custom_call.1} parent=5 // pred_check_branch
        %199 = sbr.rel (%p196) target = $region12
      $region11: #{tpu_custom_call.1} parent=5 // pred_region
        %s200 = ssub.s32 %s16, 1
        // Predicated region
        $region13: #{tpu_custom_call.1} parent=11 // pred_check
          %p201 = pneg %p54
        $region14: #{tpu_custom_call.1} parent=11 // pred_check_branch
          %203 = sbr.rel (%p201) target = $region16
        $region15: #{tpu_custom_call.1} parent=11 // pred_region
          %s204 = smul.u32 8, %s26
          %206 = vsyncadd [#allocation4], 0
          %s207 = scalar_lea.hbm %s0, %s204
          %s209 = sshll.u32 %s207, 4
          %s210 = int_to_ptr.hbm [resolvable:$true] %s209
          %s211 = sshll.u32 [#allocation3], 4
          %s212 = int_to_ptr.vmem [resolvable:$true] %s211
          %214 = dma.hbm_to_vmem [thread:$0]  %s210, 128, %s212, [#allocation4]
        $region16: #{tpu_custom_call.1} parent=11 // pred_fallthru
          _
      $region12: #{tpu_custom_call.1} parent=5 // pred_fallthru
        _
      %p215 = scmp.lt.s32.totalorder %s16, 2
      // Predicated region
      $region17: #{tpu_custom_call.1} parent=5 // pred_check
        %p216 = pneg %p215
      $region18: #{tpu_custom_call.1} parent=5 // pred_check_branch
        %218 = sbr.rel (%p216) target = $region20
      $region19: #{tpu_custom_call.1} parent=5 // pred_region
        // Predicated region
        $region21: #{tpu_custom_call.1} parent=19 // pred_check
          %p219 = pneg %p76
        $region22: #{tpu_custom_call.1} parent=19 // pred_check_branch
          %221 = sbr.rel (%p219) target = $region24
        $region23: #{tpu_custom_call.1} parent=19 // pred_region
          %s222 = sand.u32 %s16, 1
          %s223 = scalar_lea.sflag [#allocation6], %s222
          %s224 = sand.u32 %s66, 1
          %s225 = smul.addr %s224, 512
          %s226 = scalar_lea.vmem [#allocation5], %s225
          %s227 = smul.u32 128, %s24
          %229 = vsyncadd %s223, 0
          %s230 = smul.addr %s227, 2
          %s231 = sadd.s32 %s23, %s230
          %s232 = smul.addr %s231, 4
          %s233 = scalar_lea.hbm %s1, %s232
          %s234 = sshll.u32 %s233, 4
          %s235 = int_to_ptr.hbm [resolvable:$true] %s234
          %s236 = sshll.u32 %s226, 4
          %s237 = int_to_ptr.vmem [resolvable:$true] %s236
          %242 = dma.hbm_to_vmem [thread:$0]  %s235, 8192, %s237, %s223, 128, 64, 4
        $region24: #{tpu_custom_call.1} parent=19 // pred_fallthru
          _
        // Predicated region
        $region25: #{tpu_custom_call.1} parent=19 // pred_check
          %p243 = pneg %p102
        $region26: #{tpu_custom_call.1} parent=19 // pred_check_branch
          %245 = sbr.rel (%p243) target = $region28
        $region27: #{tpu_custom_call.1} parent=19 // pred_region
          %s246 = sand.u32 %s16, 1
          %s247 = scalar_lea.sflag [#allocation6], %s246
          %s248 = sand.u32 %s92, 1
          %s249 = scalar_lea.vmem [#allocation7], %s248
          %251 = vsyncadd %s247, 0
          %s252 = scalar_lea.hbm %s2, %s23
          %s254 = sshll.u32 %s252, 4
          %s255 = int_to_ptr.hbm [resolvable:$true] %s254
          %s256 = sshll.u32 %s249, 4
          %s257 = int_to_ptr.vmem [resolvable:$true] %s256
          %259 = dma.hbm_to_vmem [thread:$0]  %s255, 16, %s257, %s247
        $region28: #{tpu_custom_call.1} parent=19 // pred_fallthru
          _
        // Predicated region
        $region29: #{tpu_custom_call.1} parent=19 // pred_check
          %p260 = pneg %p128
        $region30: #{tpu_custom_call.1} parent=19 // pred_check_branch
          %262 = sbr.rel (%p260) target = $region32
        $region31: #{tpu_custom_call.1} parent=19 // pred_region
          %p263 = scmp.lt.s32.totalorder %s23, 1
          %s264 = scalar_select %p263, %s23, 1
          %s265 = scalar_lea.vmem %s3, %s264
        $region32: #{tpu_custom_call.1} parent=19 // pred_fallthru
          _
      $region20: #{tpu_custom_call.1} parent=5 // pred_fallthru
        _
      %p266 = scmp.le.s32.totalorder 1, %s16
      %p267 = scmp.lt.s32.totalorder %s16, 3
      %p268 = pnand %p266, %p267
      %p269 = pneg %p268
      // Predicated region
      $region33: #{tpu_custom_call.1} parent=5 // pred_check
        _
      $region34: #{tpu_custom_call.1} parent=5 // pred_check_branch
        %271 = sbr.rel (%p268) target = $region36
      $region35: #{tpu_custom_call.1} parent=5 // pred_region
        %s272 = ssub.s32 %s16, 1
        // Predicated region
        $region37: #{tpu_custom_call.1} parent=35 // pred_check
          %p273 = pneg %p54
        $region38: #{tpu_custom_call.1} parent=35 // pred_check_branch
          %275 = sbr.rel (%p273) target = $region40
        $region39: #{tpu_custom_call.1} parent=35 // pred_region
          %277 = dma.done [#allocation4], 128
        $region40: #{tpu_custom_call.1} parent=35 // pred_fallthru
          _
        %s278 = sand.u32 %s21, 1
        %s279 = scalar_lea.sflag [#allocation6], %s278
        %s280 = sand.u32 %s69, 1
        %s281 = smul.addr %s280, 512
        %s282 = scalar_lea.vmem [#allocation5], %s281
        // Predicated region
        $region41: #{tpu_custom_call.1} parent=35 // pred_check
          %p283 = pneg %p82
        $region42: #{tpu_custom_call.1} parent=35 // pred_check_branch
          %285 = sbr.rel (%p283) target = $region44
        $region43: #{tpu_custom_call.1} parent=35 // pred_region
          %287 = dma.done %s279, 8192
        $region44: #{tpu_custom_call.1} parent=35 // pred_fallthru
          _
        %s288 = sand.u32 %s21, 1
        %s289 = scalar_lea.sflag [#allocation6], %s288
        %s290 = sand.u32 %s95, 1
        %s291 = scalar_lea.vmem [#allocation7], %s290
        // Predicated region
        $region45: #{tpu_custom_call.1} parent=35 // pred_check
          %p292 = pneg %p108
        $region46: #{tpu_custom_call.1} parent=35 // pred_check_branch
          %294 = sbr.rel (%p292) target = $region48
        $region47: #{tpu_custom_call.1} parent=35 // pred_region
          %296 = dma.done %s289, 16
        $region48: #{tpu_custom_call.1} parent=35 // pred_fallthru
          _
        %p297 = pneg %p54
        %p298 = pneg %p51
        %s299 = sand.u32 %s21, 1
        %s300 = scalar_lea.sflag [#allocation6], %s299
        %s301 = sand.u32 %s69, 1
        %s302 = smul.addr %s301, 512
        %s303 = scalar_lea.vmem [#allocation5], %s302
        %p304 = pneg %p82
        %p305 = pneg %p79
        %s306 = sand.u32 %s21, 1
        %s307 = scalar_lea.sflag [#allocation6], %s306
        %s308 = sand.u32 %s95, 1
        %s309 = scalar_lea.vmem [#allocation7], %s308
        %p310 = pneg %p108
        %p311 = pneg %p105
        %p312 = scmp.lt.s32.totalorder %s25, 1
        %s313 = scalar_select %p312, %s25, 1
        %s314 = scalar_lea.vmem %s3, %s313
        %p315 = pneg %p134
        %p316 = pneg %p131
        %p317 = pneg %p160
        %p318 = pneg %p157
        %p319 = scmp.lt.s32.totalorder %s25, 1
        %s320 = scalar_select %p319, %s25, 1
        %s321 = smul.addr %s320, 2
        %s322 = scalar_lea.vmem %s4, %s321
        %p323 = pneg %p186
        %p324 = pneg %p183
        %p325 = scmp.lt.s32.totalorder %s25, 1
        %s326 = scalar_select %p325, %s25, 1
        %s327 = smul.addr %s326, 2
        %s328 = scalar_lea.vmem %s5, %s327
        %s329 = smul.u32 8, %s26
        %s330 = smul.u32 128, %s26
        %p331 = scmp.lt.s32.totalorder %s25, 1
        %s332 = scalar_select %p331, %s25, 1
        %s333 = scalar_lea.vmem %s3, %s332
        %p334 = scmp.lt.s32.totalorder %s25, 1
        %s335 = scalar_select %p334, %s25, 1
        %s336 = smul.addr %s335, 2
        %s337 = scalar_lea.vmem %s4, %s336
        %p338 = scmp.lt.s32.totalorder %s25, 1
        %s339 = scalar_select %p338, %s25, 1
        %s340 = smul.addr %s339, 2
        %s341 = scalar_lea.vmem %s5, %s340
        %p342 = scmp.eq.s32.totalorder %s26, 0
        // Predicated region
        $region49: #{tpu_custom_call.1} parent=35 // pred_check
          %p343 = pneg %p342
        $region50: #{tpu_custom_call.1} parent=35 // pred_check_branch
          %345 = sbr.rel (%p343) target = $region52
        $region51: #{tpu_custom_call.1} parent=35 // pred_region
          %346 = vst [vmem:[#allocation2] sm:$0x3] 0.0
        $region52: #{tpu_custom_call.1} parent=35 // pred_fallthru
          _
        %v347 = vld [vmem:[#allocation2] sm:$0x3]
        %v348 = vld [vmem:[#allocation3] sm:$0xff]
        %v349 = vld [vmem:[%s282] sm:$0xf]
        %v350 = vld [vmem:[%s282 + $0x4] sm:$0xf]
        %v351 = vld [vmem:[%s282 + $0x8] sm:$0xf]
        %v352 = vld [vmem:[%s282 + $0xc] sm:$0xf]
        %v353 = vld [vmem:[%s282 + $0x10] sm:$0xf]
        %v354 = vld [vmem:[%s282 + $0x14] sm:$0xf]
        %v355 = vld [vmem:[%s282 + $0x18] sm:$0xf]
        %v356 = vld [vmem:[%s282 + $0x1c] sm:$0xf]
        %v357 = vld [vmem:[%s282 + $0x20] sm:$0xf]
        %v358 = vld [vmem:[%s282 + $0x24] sm:$0xf]
        %v359 = vld [vmem:[%s282 + $0x28] sm:$0xf]
        %v360 = vld [vmem:[%s282 + $0x2c] sm:$0xf]
        %v361 = vld [vmem:[%s282 + $0x30] sm:$0xf]
        %v362 = vld [vmem:[%s282 + $0x34] sm:$0xf]
        %v363 = vld [vmem:[%s282 + $0x38] sm:$0xf]
        %v364 = vld [vmem:[%s282 + $0x3c] sm:$0xf]
        %v365 = vld [vmem:[%s282 + $0x40] sm:$0xf]
        %v366 = vld [vmem:[%s282 + $0x44] sm:$0xf]
        %v367 = vld [vmem:[%s282 + $0x48] sm:$0xf]
        %v368 = vld [vmem:[%s282 + $0x4c] sm:$0xf]
        %v369 = vld [vmem:[%s282 + $0x50] sm:$0xf]
        %v370 = vld [vmem:[%s282 + $0x54] sm:$0xf]
        %v371 = vld [vmem:[%s282 + $0x58] sm:$0xf]
        %v372 = vld [vmem:[%s282 + $0x5c] sm:$0xf]
        %v373 = vld [vmem:[%s282 + $0x60] sm:$0xf]
        %v374 = vld [vmem:[%s282 + $0x64] sm:$0xf]
        %v375 = vld [vmem:[%s282 + $0x68] sm:$0xf]
        %v376 = vld [vmem:[%s282 + $0x6c] sm:$0xf]
        %v377 = vld [vmem:[%s282 + $0x70] sm:$0xf]
        %v378 = vld [vmem:[%s282 + $0x74] sm:$0xf]
        %v379 = vld [vmem:[%s282 + $0x78] sm:$0xf]
        %v380 = vld [vmem:[%s282 + $0x7c] sm:$0xf]
        %v381 = vld [vmem:[%s282 + $0x80] sm:$0xf]
        %v382 = vld [vmem:[%s282 + $0x84] sm:$0xf]
        %v383 = vld [vmem:[%s282 + $0x88] sm:$0xf]
        %v384 = vld [vmem:[%s282 + $0x8c] sm:$0xf]
        %v385 = vld [vmem:[%s282 + $0x90] sm:$0xf]
        %v386 = vld [vmem:[%s282 + $0x94] sm:$0xf]
        %v387 = vld [vmem:[%s282 + $0x98] sm:$0xf]
        %v388 = vld [vmem:[%s282 + $0x9c] sm:$0xf]
        %v389 = vld [vmem:[%s282 + $0xa0] sm:$0xf]
        %v390 = vld [vmem:[%s282 + $0xa4] sm:$0xf]
        %v391 = vld [vmem:[%s282 + $0xa8] sm:$0xf]
        %v392 = vld [vmem:[%s282 + $0xac] sm:$0xf]
        %v393 = vld [vmem:[%s282 + $0xb0] sm:$0xf]
        %v394 = vld [vmem:[%s282 + $0xb4] sm:$0xf]
        %v395 = vld [vmem:[%s282 + $0xb8] sm:$0xf]
        %v396 = vld [vmem:[%s282 + $0xbc] sm:$0xf]
        %v397 = vld [vmem:[%s282 + $0xc0] sm:$0xf]
        %v398 = vld [vmem:[%s282 + $0xc4] sm:$0xf]
        %v399 = vld [vmem:[%s282 + $0xc8] sm:$0xf]
        %v400 = vld [vmem:[%s282 + $0xcc] sm:$0xf]
        %v401 = vld [vmem:[%s282 + $0xd0] sm:$0xf]
        %v402 = vld [vmem:[%s282 + $0xd4] sm:$0xf]
        %v403 = vld [vmem:[%s282 + $0xd8] sm:$0xf]
        %v404 = vld [vmem:[%s282 + $0xdc] sm:$0xf]
        %v405 = vld [vmem:[%s282 + $0xe0] sm:$0xf]
        %v406 = vld [vmem:[%s282 + $0xe4] sm:$0xf]
        %v407 = vld [vmem:[%s282 + $0xe8] sm:$0xf]
        %v408 = vld [vmem:[%s282 + $0xec] sm:$0xf]
        %v409 = vld [vmem:[%s282 + $0xf0] sm:$0xf]
        %v410 = vld [vmem:[%s282 + $0xf4] sm:$0xf]
        %v411 = vld [vmem:[%s282 + $0xf8] sm:$0xf]
        %v412 = vld [vmem:[%s282 + $0xfc] sm:$0xf]
        %v413 = vld [vmem:[%s282 + $0x100] sm:$0xf]
        %v414 = vld [vmem:[%s282 + $0x104] sm:$0xf]
        %v415 = vld [vmem:[%s282 + $0x108] sm:$0xf]
        %v416 = vld [vmem:[%s282 + $0x10c] sm:$0xf]
        %v417 = vld [vmem:[%s282 + $0x110] sm:$0xf]
        %v418 = vld [vmem:[%s282 + $0x114] sm:$0xf]
        %v419 = vld [vmem:[%s282 + $0x118] sm:$0xf]
        %v420 = vld [vmem:[%s282 + $0x11c] sm:$0xf]
        %v421 = vld [vmem:[%s282 + $0x120] sm:$0xf]
        %v422 = vld [vmem:[%s282 + $0x124] sm:$0xf]
        %v423 = vld [vmem:[%s282 + $0x128] sm:$0xf]
        %v424 = vld [vmem:[%s282 + $0x12c] sm:$0xf]
        %v425 = vld [vmem:[%s282 + $0x130] sm:$0xf]
        %v426 = vld [vmem:[%s282 + $0x134] sm:$0xf]
        %v427 = vld [vmem:[%s282 + $0x138] sm:$0xf]
        %v428 = vld [vmem:[%s282 + $0x13c] sm:$0xf]
        %v429 = vld [vmem:[%s282 + $0x140] sm:$0xf]
        %v430 = vld [vmem:[%s282 + $0x144] sm:$0xf]
        %v431 = vld [vmem:[%s282 + $0x148] sm:$0xf]
        %v432 = vld [vmem:[%s282 + $0x14c] sm:$0xf]
        %v433 = vld [vmem:[%s282 + $0x150] sm:$0xf]
        %v434 = vld [vmem:[%s282 + $0x154] sm:$0xf]
        %v435 = vld [vmem:[%s282 + $0x158] sm:$0xf]
        %v436 = vld [vmem:[%s282 + $0x15c] sm:$0xf]
        %v437 = vld [vmem:[%s282 + $0x160] sm:$0xf]
        %v438 = vld [vmem:[%s282 + $0x164] sm:$0xf]
        %v439 = vld [vmem:[%s282 + $0x168] sm:$0xf]
        %v440 = vld [vmem:[%s282 + $0x16c] sm:$0xf]
        %v441 = vld [vmem:[%s282 + $0x170] sm:$0xf]
        %v442 = vld [vmem:[%s282 + $0x174] sm:$0xf]
        %v443 = vld [vmem:[%s282 + $0x178] sm:$0xf]
        %v444 = vld [vmem:[%s282 + $0x17c] sm:$0xf]
        %v445 = vld [vmem:[%s282 + $0x180] sm:$0xf]
        %v446 = vld [vmem:[%s282 + $0x184] sm:$0xf]
        %v447 = vld [vmem:[%s282 + $0x188] sm:$0xf]
        %v448 = vld [vmem:[%s282 + $0x18c] sm:$0xf]
        %v449 = vld [vmem:[%s282 + $0x190] sm:$0xf]
        %v450 = vld [vmem:[%s282 + $0x194] sm:$0xf]
        %v451 = vld [vmem:[%s282 + $0x198] sm:$0xf]
        %v452 = vld [vmem:[%s282 + $0x19c] sm:$0xf]
        %v453 = vld [vmem:[%s282 + $0x1a0] sm:$0xf]
        %v454 = vld [vmem:[%s282 + $0x1a4] sm:$0xf]
        %v455 = vld [vmem:[%s282 + $0x1a8] sm:$0xf]
        %v456 = vld [vmem:[%s282 + $0x1ac] sm:$0xf]
        %v457 = vld [vmem:[%s282 + $0x1b0] sm:$0xf]
        %v458 = vld [vmem:[%s282 + $0x1b4] sm:$0xf]
        %v459 = vld [vmem:[%s282 + $0x1b8] sm:$0xf]
        %v460 = vld [vmem:[%s282 + $0x1bc] sm:$0xf]
        %v461 = vld [vmem:[%s282 + $0x1c0] sm:$0xf]
        %v462 = vld [vmem:[%s282 + $0x1c4] sm:$0xf]
        %v463 = vld [vmem:[%s282 + $0x1c8] sm:$0xf]
        %v464 = vld [vmem:[%s282 + $0x1cc] sm:$0xf]
        %v465 = vld [vmem:[%s282 + $0x1d0] sm:$0xf]
        %v466 = vld [vmem:[%s282 + $0x1d4] sm:$0xf]
        %v467 = vld [vmem:[%s282 + $0x1d8] sm:$0xf]
        %v468 = vld [vmem:[%s282 + $0x1dc] sm:$0xf]
        %v469 = vld [vmem:[%s282 + $0x1e0] sm:$0xf]
        %v470 = vld [vmem:[%s282 + $0x1e4] sm:$0xf]
        %v471 = vld [vmem:[%s282 + $0x1e8] sm:$0xf]
        %v472 = vld [vmem:[%s282 + $0x1ec] sm:$0xf]
        %v473 = vld [vmem:[%s282 + $0x1f0] sm:$0xf]
        %v474 = vld [vmem:[%s282 + $0x1f4] sm:$0xf]
        %v475 = vld [vmem:[%s282 + $0x1f8] sm:$0xf]
        %v476 = vld [vmem:[%s282 + $0x1fc] sm:$0xf]
        %478 = vst [vmem:[#allocation1] ss:$9 sm:$0xff] %v348
        %v479 = vld [vmem:[#allocation1] sm:$0xff]
        %v480 = vld [vmem:[#allocation1 + $0x9] sm:$0xff]
        %v481 = vld [vmem:[#allocation1 + $0x12] sm:$0xff]
        %v482 = vld [vmem:[#allocation1 + $0x1b] sm:$0xff]
        %v483 = vld [vmem:[#allocation1 + $0x24] sm:$0xff]
        %v484 = vld [vmem:[#allocation1 + $0x2d] sm:$0xff]
        %v485 = vld [vmem:[#allocation1 + $0x36] sm:$0xff]
        %v486 = vld [vmem:[#allocation1 + $0x3f] sm:$0xff]
        %v623 = vunpack.c.l.b16 %v349
        %v624 = vunpack.c.l.b16 %v350
        %v625 = vunpack.c.l.b16 %v351
        %v626 = vunpack.c.l.b16 %v352
        %v627 = vunpack.c.l.b16 %v353
        %v628 = vunpack.c.l.b16 %v354
        %v629 = vunpack.c.l.b16 %v355
        %v630 = vunpack.c.l.b16 %v356
        %v631 = vunpack.c.l.b16 %v357
        %v632 = vunpack.c.l.b16 %v358
        %v633 = vunpack.c.l.b16 %v359
        %v634 = vunpack.c.l.b16 %v360
        %v635 = vunpack.c.l.b16 %v361
        %v636 = vunpack.c.l.b16 %v362
        %v637 = vunpack.c.l.b16 %v363
        %v638 = vunpack.c.l.b16 %v364
        %v639 = vunpack.c.l.b16 %v365
        %v640 = vunpack.c.l.b16 %v366
        %v641 = vunpack.c.l.b16 %v367
        %v642 = vunpack.c.l.b16 %v368
        %v643 = vunpack.c.l.b16 %v369
        %v644 = vunpack.c.l.b16 %v370
        %v645 = vunpack.c.l.b16 %v371
        %v646 = vunpack.c.l.b16 %v372
        %v647 = vunpack.c.l.b16 %v373
        %v648 = vunpack.c.l.b16 %v374
        %v649 = vunpack.c.l.b16 %v375
        %v650 = vunpack.c.l.b16 %v376
        %v651 = vunpack.c.l.b16 %v377
        %v652 = vunpack.c.l.b16 %v378
        %v653 = vunpack.c.l.b16 %v379
        %v654 = vunpack.c.l.b16 %v380
        %v655 = vunpack.c.l.b16 %v381
        %v656 = vunpack.c.l.b16 %v382
        %v657 = vunpack.c.l.b16 %v383
        %v658 = vunpack.c.l.b16 %v384
        %v659 = vunpack.c.l.b16 %v385
        %v660 = vunpack.c.l.b16 %v386
        %v661 = vunpack.c.l.b16 %v387
        %v662 = vunpack.c.l.b16 %v388
        %v663 = vunpack.c.l.b16 %v389
        %v664 = vunpack.c.l.b16 %v390
        %v665 = vunpack.c.l.b16 %v391
        %v666 = vunpack.c.l.b16 %v392
        %v667 = vunpack.c.l.b16 %v393
        %v668 = vunpack.c.l.b16 %v394
        %v669 = vunpack.c.l.b16 %v395
        %v670 = vunpack.c.l.b16 %v396
        %v671 = vunpack.c.l.b16 %v397
        %v672 = vunpack.c.l.b16 %v398
        %v673 = vunpack.c.l.b16 %v399
        %v674 = vunpack.c.l.b16 %v400
        %v675 = vunpack.c.l.b16 %v401
        %v676 = vunpack.c.l.b16 %v402
        %v677 = vunpack.c.l.b16 %v403
        %v678 = vunpack.c.l.b16 %v404
        %v679 = vunpack.c.l.b16 %v405
        %v680 = vunpack.c.l.b16 %v406
        %v681 = vunpack.c.l.b16 %v407
        %v682 = vunpack.c.l.b16 %v408
        %v683 = vunpack.c.l.b16 %v409
        %v684 = vunpack.c.l.b16 %v410
        %v685 = vunpack.c.l.b16 %v411
        %v686 = vunpack.c.l.b16 %v412
        %v687 = vunpack.c.l.b16 %v413
        %v688 = vunpack.c.l.b16 %v414
        %v689 = vunpack.c.l.b16 %v415
        %v690 = vunpack.c.l.b16 %v416
        %v691 = vunpack.c.l.b16 %v417
        %v692 = vunpack.c.l.b16 %v418
        %v693 = vunpack.c.l.b16 %v419
        %v694 = vunpack.c.l.b16 %v420
        %v695 = vunpack.c.l.b16 %v421
        %v696 = vunpack.c.l.b16 %v422
        %v697 = vunpack.c.l.b16 %v423
        %v698 = vunpack.c.l.b16 %v424
        %v699 = vunpack.c.l.b16 %v425
        %v700 = vunpack.c.l.b16 %v426
        %v701 = vunpack.c.l.b16 %v427
        %v702 = vunpack.c.l.b16 %v428
        %v703 = vunpack.c.l.b16 %v429
        %v704 = vunpack.c.l.b16 %v430
        %v705 = vunpack.c.l.b16 %v431
        %v706 = vunpack.c.l.b16 %v432
        %v707 = vunpack.c.l.b16 %v433
        %v708 = vunpack.c.l.b16 %v434
        %v709 = vunpack.c.l.b16 %v435
        %v710 = vunpack.c.l.b16 %v436
        %v711 = vunpack.c.l.b16 %v437
        %v712 = vunpack.c.l.b16 %v438
        %v713 = vunpack.c.l.b16 %v439
        %v714 = vunpack.c.l.b16 %v440
        %v715 = vunpack.c.l.b16 %v441
        %v716 = vunpack.c.l.b16 %v442
        %v717 = vunpack.c.l.b16 %v443
        %v718 = vunpack.c.l.b16 %v444
        %v719 = vunpack.c.l.b16 %v445
        %v720 = vunpack.c.l.b16 %v446
        %v721 = vunpack.c.l.b16 %v447
        %v722 = vunpack.c.l.b16 %v448
        %v723 = vunpack.c.l.b16 %v449
        %v724 = vunpack.c.l.b16 %v450
        %v725 = vunpack.c.l.b16 %v451
        %v726 = vunpack.c.l.b16 %v452
        %v727 = vunpack.c.l.b16 %v453
        %v728 = vunpack.c.l.b16 %v454
        %v729 = vunpack.c.l.b16 %v455
        %v730 = vunpack.c.l.b16 %v456
        %v731 = vunpack.c.l.b16 %v457
        %v732 = vunpack.c.l.b16 %v458
        %v733 = vunpack.c.l.b16 %v459
        %v734 = vunpack.c.l.b16 %v460
        %v735 = vunpack.c.l.b16 %v461
        %v736 = vunpack.c.l.b16 %v462
        %v737 = vunpack.c.l.b16 %v463
        %v738 = vunpack.c.l.b16 %v464
        %v739 = vunpack.c.l.b16 %v465
        %v740 = vunpack.c.l.b16 %v466
        %v741 = vunpack.c.l.b16 %v467
        %v742 = vunpack.c.l.b16 %v468
        %v743 = vunpack.c.l.b16 %v469
        %v744 = vunpack.c.l.b16 %v470
        %v745 = vunpack.c.l.b16 %v471
        %v746 = vunpack.c.l.b16 %v472
        %v747 = vunpack.c.l.b16 %v473
        %v748 = vunpack.c.l.b16 %v474
        %v749 = vunpack.c.l.b16 %v475
        %v750 = vunpack.c.l.b16 %v476
        %v751 = vpack.c.b16 %v624, %v623
        %v752 = vpack.c.b16 %v626, %v625
        %v753 = vpack.c.b16 %v628, %v627
        %v754 = vpack.c.b16 %v630, %v629
        %v755 = vpack.c.b16 %v632, %v631
        %v756 = vpack.c.b16 %v634, %v633
        %v757 = vpack.c.b16 %v636, %v635
        %v758 = vpack.c.b16 %v638, %v637
        %v759 = vpack.c.b16 %v640, %v639
        %v760 = vpack.c.b16 %v642, %v641
        %v761 = vpack.c.b16 %v644, %v643
        %v762 = vpack.c.b16 %v646, %v645
        %v763 = vpack.c.b16 %v648, %v647
        %v764 = vpack.c.b16 %v650, %v649
        %v765 = vpack.c.b16 %v652, %v651
        %v766 = vpack.c.b16 %v654, %v653
        %v767 = vpack.c.b16 %v656, %v655
        %v768 = vpack.c.b16 %v658, %v657
        %v769 = vpack.c.b16 %v660, %v659
        %v770 = vpack.c.b16 %v662, %v661
        %v771 = vpack.c.b16 %v664, %v663
        %v772 = vpack.c.b16 %v666, %v665
        %v773 = vpack.c.b16 %v668, %v667
        %v774 = vpack.c.b16 %v670, %v669
        %v775 = vpack.c.b16 %v672, %v671
        %v776 = vpack.c.b16 %v674, %v673
        %v777 = vpack.c.b16 %v676, %v675
        %v778 = vpack.c.b16 %v678, %v677
        %v779 = vpack.c.b16 %v680, %v679
        %v780 = vpack.c.b16 %v682, %v681
        %v781 = vpack.c.b16 %v684, %v683
        %v782 = vpack.c.b16 %v686, %v685
        %v783 = vpack.c.b16 %v688, %v687
        %v784 = vpack.c.b16 %v690, %v689
        %v785 = vpack.c.b16 %v692, %v691
        %v786 = vpack.c.b16 %v694, %v693
        %v787 = vpack.c.b16 %v696, %v695
        %v788 = vpack.c.b16 %v698, %v697
        %v789 = vpack.c.b16 %v700, %v699
        %v790 = vpack.c.b16 %v702, %v701
        %v791 = vpack.c.b16 %v704, %v703
        %v792 = vpack.c.b16 %v706, %v705
        %v793 = vpack.c.b16 %v708, %v707
        %v794 = vpack.c.b16 %v710, %v709
        %v795 = vpack.c.b16 %v712, %v711
        %v796 = vpack.c.b16 %v714, %v713
        %v797 = vpack.c.b16 %v716, %v715
        %v798 = vpack.c.b16 %v718, %v717
        %v799 = vpack.c.b16 %v720, %v719
        %v800 = vpack.c.b16 %v722, %v721
        %v801 = vpack.c.b16 %v724, %v723
        %v802 = vpack.c.b16 %v726, %v725
        %v803 = vpack.c.b16 %v728, %v727
        %v804 = vpack.c.b16 %v730, %v729
        %v805 = vpack.c.b16 %v732, %v731
        %v806 = vpack.c.b16 %v734, %v733
        %v807 = vpack.c.b16 %v736, %v735
        %v808 = vpack.c.b16 %v738, %v737
        %v809 = vpack.c.b16 %v740, %v739
        %v810 = vpack.c.b16 %v742, %v741
        %v811 = vpack.c.b16 %v744, %v743
        %v812 = vpack.c.b16 %v746, %v745
        %v813 = vpack.c.b16 %v748, %v747
        %v814 = vpack.c.b16 %v750, %v749
        %879 = vmatpush.bf16.msra.mxu0 %v758
        %880 = vmatpush.bf16.msra.mxu0 %v757
        %881 = vmatpush.bf16.msra.mxu0 %v756
        %882 = vmatpush.bf16.msra.mxu0 %v755
        %883 = vmatpush.bf16.msra.mxu0 %v754
        %884 = vmatpush.bf16.msra.mxu0 %v753
        %885 = vmatpush.bf16.msra.mxu0 %v752
        %886 = vmatpush.bf16.msra.mxu0 %v751
        %887 = vmatmul.bf16.gmra.mxu0 %v479
        %v888 = vpop.f32.mrf.mxu0
        %v889 = vadd.f32 0.0, %v888
        %v890 = vpop.f32.mrf.mxu0
        %891 = vdwg.mxu0
        %892 = vmatpush.bf16.msra.mxu0 %v766
        %893 = vmatpush.bf16.msra.mxu0 %v765
        %894 = vmatpush.bf16.msra.mxu0 %v764
        %895 = vmatpush.bf16.msra.mxu0 %v763
        %896 = vmatpush.bf16.msra.mxu0 %v762
        %897 = vmatpush.bf16.msra.mxu0 %v761
        %898 = vmatpush.bf16.msra.mxu0 %v760
        %899 = vmatpush.bf16.msra.mxu0 %v759
        %900 = vmatmul.bf16.gmra.mxu0 %v480
        %v901 = vpop.f32.mrf.mxu0
        %v902 = vadd.f32 %v889, %v901
        %v903 = vpop.f32.mrf.mxu0
        %904 = vdwg.mxu0
        %905 = vmatpush.bf16.msra.mxu0 %v774
        %906 = vmatpush.bf16.msra.mxu0 %v773
        %907 = vmatpush.bf16.msra.mxu0 %v772
        %908 = vmatpush.bf16.msra.mxu0 %v771
        %909 = vmatpush.bf16.msra.mxu0 %v770
        %910 = vmatpush.bf16.msra.mxu0 %v769
        %911 = vmatpush.bf16.msra.mxu0 %v768
        %912 = vmatpush.bf16.msra.mxu0 %v767
        %913 = vmatmul.bf16.gmra.mxu0 %v481
        %v914 = vpop.f32.mrf.mxu0
        %v915 = vadd.f32 %v902, %v914
        %v916 = vpop.f32.mrf.mxu0
        %917 = vdwg.mxu0
        %918 = vmatpush.bf16.msra.mxu0 %v782
        %919 = vmatpush.bf16.msra.mxu0 %v781
        %920 = vmatpush.bf16.msra.mxu0 %v780
        %921 = vmatpush.bf16.msra.mxu0 %v779
        %922 = vmatpush.bf16.msra.mxu0 %v778
        %923 = vmatpush.bf16.msra.mxu0 %v777
        %924 = vmatpush.bf16.msra.mxu0 %v776
        %925 = vmatpush.bf16.msra.mxu0 %v775
        %926 = vmatmul.bf16.gmra.mxu0 %v482
        %v927 = vpop.f32.mrf.mxu0
        %v928 = vadd.f32 %v915, %v927
        %v929 = vpop.f32.mrf.mxu0
        %930 = vdwg.mxu0
        %931 = vmatpush.bf16.msra.mxu0 %v790
        %932 = vmatpush.bf16.msra.mxu0 %v789
        %933 = vmatpush.bf16.msra.mxu0 %v788
        %934 = vmatpush.bf16.msra.mxu0 %v787
        %935 = vmatpush.bf16.msra.mxu0 %v786
        %936 = vmatpush.bf16.msra.mxu0 %v785
        %937 = vmatpush.bf16.msra.mxu0 %v784
        %938 = vmatpush.bf16.msra.mxu0 %v783
        %939 = vmatmul.bf16.gmra.mxu0 %v483
        %v940 = vpop.f32.mrf.mxu0
        %v941 = vadd.f32 %v928, %v940
        %v942 = vpop.f32.mrf.mxu0
        %943 = vdwg.mxu0
        %944 = vmatpush.bf16.msra.mxu0 %v798
        %945 = vmatpush.bf16.msra.mxu0 %v797
        %946 = vmatpush.bf16.msra.mxu0 %v796
        %947 = vmatpush.bf16.msra.mxu0 %v795
        %948 = vmatpush.bf16.msra.mxu0 %v794
        %949 = vmatpush.bf16.msra.mxu0 %v793
        %950 = vmatpush.bf16.msra.mxu0 %v792
        %951 = vmatpush.bf16.msra.mxu0 %v791
        %952 = vmatmul.bf16.gmra.mxu0 %v484
        %v953 = vpop.f32.mrf.mxu0
        %v954 = vadd.f32 %v941, %v953
        %v955 = vpop.f32.mrf.mxu0
        %956 = vdwg.mxu0
        %957 = vmatpush.bf16.msra.mxu0 %v806
        %958 = vmatpush.bf16.msra.mxu0 %v805
        %959 = vmatpush.bf16.msra.mxu0 %v804
        %960 = vmatpush.bf16.msra.mxu0 %v803
        %961 = vmatpush.bf16.msra.mxu0 %v802
        %962 = vmatpush.bf16.msra.mxu0 %v801
        %963 = vmatpush.bf16.msra.mxu0 %v800
        %964 = vmatpush.bf16.msra.mxu0 %v799
        %965 = vmatmul.bf16.gmra.mxu0 %v485
        %v966 = vpop.f32.mrf.mxu0
        %v967 = vadd.f32 %v954, %v966
        %v968 = vpop.f32.mrf.mxu0
        %969 = vdwg.mxu0
        %970 = vmatpush.bf16.msra.mxu0 %v814
        %971 = vmatpush.bf16.msra.mxu0 %v813
        %972 = vmatpush.bf16.msra.mxu0 %v812
        %973 = vmatpush.bf16.msra.mxu0 %v811
        %974 = vmatpush.bf16.msra.mxu0 %v810
        %975 = vmatpush.bf16.msra.mxu0 %v809
        %976 = vmatpush.bf16.msra.mxu0 %v808
        %977 = vmatpush.bf16.msra.mxu0 %v807
        %978 = vmatmul.bf16.gmra.mxu0 %v486
        %v979 = vpop.f32.mrf.mxu0
        %v980 = vadd.f32 %v967, %v979
        %v981 = vpop.f32.mrf.mxu0
        %982 = vdwg.mxu0
        %v983 = vadd.f32 %v347, %v980
        %984 = vst [vmem:[#allocation2] sm:$0x3] %v983
        // Predicated region
        $region53: #{tpu_custom_call.1} parent=35 // pred_check
          %p985 = pneg %p342
        $region54: #{tpu_custom_call.1} parent=35 // pred_check_branch
          %987 = sbr.rel (%p985) target = $region56
        $region55: #{tpu_custom_call.1} parent=35 // pred_region
          %v988 = vld [vmem:[#allocation2] sm:$0x3]
          %v989 = vld [vmem:[%s291] sm:$0x1]
          %v991 = vperm.slane %v989, 0
          %v993 = vadd.f32 %v988, %v991
          %v994 = vmul.f32 %v993, %v993
          %vm995 = vcmask 1041408
          %v996 = vsel %vm995, %v994, 0.0
          %997 = vadd.xlane.f32.xlu0 %v996
          %v998 = vpop.xlane.xlu0 %997
          %v999 = vld [vmem:[%s333] sm:$0x1]
          %v1001 = vperm.slane %v999, 0
          %v1003 = vmul.f32 %v993, %v1001
          %v1004 = vsel %vm995, %v1003, 0.0
          %1005 = vadd.xlane.f32.xlu0 %v1004
          %v1006 = vpop.xlane.xlu0 %1005
          %vm1007 = vcmask 1024
          %1008 = vst.msk [vmem:[%s337] sm:$0x3] %vm1007, %v998
          %1009 = vst.msk [vmem:[%s341] sm:$0x3] %vm1007, %v1006
        $region56: #{tpu_custom_call.1} parent=35 // pred_fallthru
          _
        %p1010 = scmp.lt.s32.totalorder %s25, 1
        %s1011 = scalar_select %p1010, %s25, 1
        %s1012 = smul.addr %s1011, 2
        %s1013 = scalar_lea.vmem %s4, %s1012
        %p1014 = scmp.lt.s32.totalorder %s25, 1
        %s1015 = scalar_select %p1014, %s25, 1
        %s1016 = smul.addr %s1015, 2
        %s1017 = scalar_lea.vmem %s5, %s1016
        // Predicated region
        $region57: #{tpu_custom_call.1} parent=35 // pred_check
          %p1018 = pneg %p157
        $region58: #{tpu_custom_call.1} parent=35 // pred_check_branch
          %1020 = sbr.rel (%p1018) target = $region60
        $region59: #{tpu_custom_call.1} parent=35 // pred_region
          _
        $region60: #{tpu_custom_call.1} parent=35 // pred_fallthru
          _
        // Predicated region
        $region61: #{tpu_custom_call.1} parent=35 // pred_check
          %p1021 = pneg %p183
        $region62: #{tpu_custom_call.1} parent=35 // pred_check_branch
          %1023 = sbr.rel (%p1021) target = $region64
        $region63: #{tpu_custom_call.1} parent=35 // pred_region
          _
        $region64: #{tpu_custom_call.1} parent=35 // pred_fallthru
          _
      $region36: #{tpu_custom_call.1} parent=5 // pred_fallthru
        _
      %p1024 = scmp.le.s32.totalorder 2, %s16
      // Predicated region
      $region65: #{tpu_custom_call.1} parent=5 // pred_check
        %p1025 = pneg %p1024
      $region66: #{tpu_custom_call.1} parent=5 // pred_check_branch
        %1027 = sbr.rel (%p1025) target = $region68
      $region67: #{tpu_custom_call.1} parent=5 // pred_region
        %s1028 = ssub.s32 %s16, 2
        // Predicated region
        $region69: #{tpu_custom_call.1} parent=67 // pred_check
          %p1029 = pneg %p163
        $region70: #{tpu_custom_call.1} parent=67 // pred_check_branch
          %1031 = sbr.rel (%p1029) target = $region72
        $region71: #{tpu_custom_call.1} parent=67 // pred_region
          %p1032 = scmp.lt.s32.totalorder %s27, 1
          %s1033 = scalar_select %p1032, %s27, 1
          %s1034 = smul.addr %s1033, 2
          %s1035 = scalar_lea.vmem %s4, %s1034
        $region72: #{tpu_custom_call.1} parent=67 // pred_fallthru
          _
        // Predicated region
        $region73: #{tpu_custom_call.1} parent=67 // pred_check
          %p1036 = pneg %p189
        $region74: #{tpu_custom_call.1} parent=67 // pred_check_branch
          %1038 = sbr.rel (%p1036) target = $region76
        $region75: #{tpu_custom_call.1} parent=67 // pred_region
          %p1039 = scmp.lt.s32.totalorder %s27, 1
          %s1040 = scalar_select %p1039, %s27, 1
          %s1041 = smul.addr %s1040, 2
          %s1042 = scalar_lea.vmem %s5, %s1041
        $region76: #{tpu_custom_call.1} parent=67 // pred_fallthru
          _
      $region68: #{tpu_custom_call.1} parent=5 // pred_fallthru
        _
    $region6: #{tpu_custom_call.1} parent=1 // loop_footer
      %s20 = sadd.s32 1, %s16
    $region7: #{tpu_custom_call.1} parent=1 // loop_footer_branch
      %15 = sbr.rel target = $region3
    $region8: #{tpu_custom_call.1} parent=1 // loop_exit
      _
    %1043 = vsyncpa [#allocation4], 1
    %s1044 = scalar_lea.sflag [#allocation4], 1
    %1045 = vsyncpa %s1044, 1
    %1046 = vsyncpa [#allocation6], 1
    %s1047 = scalar_lea.sflag [#allocation6], 1
    %1048 = vsyncpa %s1047, 1

</llo_original>
